<compile_context>
chip_gen: v7x
topology: tpu7x:2x2x1
jax: 0.10.0
libtpu: 0.0.40
codegen_flags: <defaults>
</compile_context>

<pallas_src>
import numpy as np
import jax
import jax.numpy as jnp
from jax import lax
from jax.experimental import pallas as pl
from jax.experimental.pallas import tpu as pltpu

NUM_BITS = 4
BLOCK_SIZE = 64
LANE = 128
# _BlockQuantizer uniform map: torch.linspace(-1, 1, 16)  ==  idx * (2/15) - 1
DEQ_STEP = 2.0 / (2 ** NUM_BITS - 1)
UNIFORM_TABLE = np.linspace(-1.0, 1.0, 2 ** NUM_BITS).astype(np.float32)
# Explicit scoped-VMEM budget (safe on v5e/v6e/v7x for these kernels; sweep up to ~96 MiB on
# v5e/v6e and <=48 MiB on v7x when layer sizes / tm grow).
VMEM_LIMIT_BYTES = 32 * 1024 * 1024


def _round_up(x, m):
    return (x + m - 1) // m * m


# ----------------------------------------------------------------------------
# Kernel 1: one-shot 4-bit dequant + per-block scale + LoRA fold  ->  bf16 W_eff^T
# (grid tiled over output-channel lane blocks; bounds VMEM and parallelizes)
# ----------------------------------------------------------------------------
def _dequant_fold_kernel(qw_ref, slo_ref, shi_ref, off_ref, aT_ref, bT_ref, w_ref):
    words = qw_ref[...]                              # (Kw, co_t) int32, 8 nibbles / word
    kw_rows, co_t = words.shape
    kp = kw_rows * 8

    # nibble plane j holds rows [j*Kw, (j+1)*Kw) of W^T in the original flat-k order; each
    # plane is an integer number of 8-row sublane tiles, so the concat is layout-free.
    # NOTE: keep the "& 0xF" -- plane 7 relies on it to mask int32 sign extension.
    planes = [((words >> (4 * j)) & 0xF) for j in range(8)]
    idx = jnp.concatenate(planes, axis=0).astype(jnp.float32)   # (kp, co_t)
    w_norm = idx * DEQ_STEP - 1.0                    # closed-form uniform LUT (no select chain)

    # per-element scale = scales[(c*K + k) // 64].  Within a 64-row slab of k the scale takes
    # at most two values per column; the boundary is k_loc + off >= 64, so one select per slab
    # replaces the previous O(num_blocks) select chain.  (1, co_t) rows broadcast in the where.
    off = off_ref[...]                               # (1, co_t) int32
    k_loc = lax.broadcasted_iota(jnp.int32, (BLOCK_SIZE, co_t), 0)
    crosses = (k_loc + off) >= BLOCK_SIZE            # (64, co_t) bool
    n_slab = kp // BLOCK_SIZE
    slabs = [jnp.where(crosses, shi_ref[t:t + 1, :], slo_ref[t:t + 1, :])
             for t in range(n_slab)]
    scale = slabs[0] if n_slab == 1 else jnp.concatenate(slabs, axis=0)
    w_deq = w_norm * scale                           # dequantized W^T, (kp, co_t) f32

    # fold LoRA into the effective weight:  (patches @ A^T) @ B^T == patches @ (A^T @ B^T)
    lora = jnp.dot(aT_ref[...], bT_ref[...], preferred_element_type=jnp.float32)  # (kp, co_t)
    # rows >= K and columns >= C_out contain bounded garbage; the wrapper slices them away
    # before they can ever be consumed (documented invariant).
    w_ref[...] = (w_deq + lora).astype(w_ref.dtype)


# ----------------------------------------------------------------------------
# Kernel 2: fused direct conv (implicit GEMM).  The padded image for one sample stays
# VMEM-resident across row tiles; one MXU dot per conv tap, f32 accumulation, bf16 store.
# ----------------------------------------------------------------------------
def _make_fused_conv_kernel(kH, kW, C_in, th, W_out, sh, sw):
    def kernel(x_ref, w_ref, b_ref, o_ref):
        # x_ref: (Hp_ext, Wp, C_in)   bf16  whole padded image (resident across row tiles)
        # w_ref: (kH*kW, C_in, CO_p)  bf16  effective weight (dequant + LoRA), tap-major
        # b_ref: (1, CO_p)            f32   bias (zero-padded lanes)
        # o_ref: (th*W_out, CO_p)     bf16  lane-dense output tile
        t = pl.program_id(1)
        row0 = t * (th * sh)
        co_p = o_ref.shape[-1]
        acc = jnp.zeros((th * W_out, co_p), jnp.float32)
        for kh in range(kH):
            rsl = pl.ds(row0 + kh, th) if sh == 1 else pl.ds(row0 + kh, th, stride=sh)
            for kw_ in range(kW):
                csl = pl.ds(kw_, W_out) if sw == 1 else pl.ds(kw_, W_out, stride=sw)
                # (th, W_out, C_in) slice -> (tm, C_in); lane dim (C_in) unchanged, leading
                # dims merge onto full sublane tiles (cheap relayout).
                piece = x_ref[rsl, csl, :].reshape(th * W_out, C_in)
                acc = acc + jnp.dot(piece, w_ref[kh * kW + kw_],
                                    preferred_element_type=jnp.float32)
        o_ref[...] = (acc + b_ref[...]).astype(o_ref.dtype)

    return kernel


# ----------------------------------------------------------------------------
# One-time (weight-load-time) repack of the quantized layer into kernel operands.
# Keeps the base weight 4-bit packed; LoRA factors / bias zero-padded lane-dense.
# ----------------------------------------------------------------------------
def prepare_quantized_conv2d(qweight_pack, scales, w4d_shape, a4d, b4d, bias):
    C_out, C_in_g, kH, kW = (int(v) for v in w4d_shape)
    K = C_in_g * kH * kW
    R = int(a4d.shape[0])

    CO_p = _round_up(C_out, LANE)       # lane-dense output channels
    Kp = _round_up(K, 64)               # weight rows (nibble planes sublane-aligned)
    Kw = Kp // 8
    R8 = _round_up(R, 8)
    n_slab = Kp // BLOCK_SIZE

    # -- unpack the module's byte packing (2 nibbles / uint8 over the flat C_out*K order) --
    bytes_np = np.asarray(qweight_pack).reshape(-1).astype(np.uint8)
    low = bytes_np & 0xF
    high = (bytes_np >> 4) & 0xF
    idx_flat = np.stack([low, high], axis=-1).reshape(-1)
    numel = C_out * K
    idxT = np.zeros((Kp, CO_p), dtype=np.uint64)
    idxT[:K, :C_out] = idx_flat[:numel].reshape(C_out, K).T

    # -- repack 8 nibbles / int32, plane-major along K so the in-kernel unpack is layout-free --
    words = np.zeros((Kw, CO_p), dtype=np.uint64)
    for j in range(8):
        words |= idxT[j * Kw:(j + 1) * Kw, :] << np.uint64(4 * j)
    qwords = jnp.asarray(words.astype(np.uint32).view(np.int32))

    # -- per-column, per-64-row-slab scale tables (blocks of 64 along flat (C_out, K) order) --
    scales_np = np.asarray(scales).astype(np.float32).reshape(-1)
    num_blocks = scales_np.shape[0]
    cc = np.arange(C_out)
    base = (cc[None, :] * K + np.arange(n_slab)[:, None] * BLOCK_SIZE) // BLOCK_SIZE
    stab_lo = np.ones((n_slab, CO_p), dtype=np.float32)
    stab_hi = np.ones((n_slab, CO_p), dtype=np.float32)
    stab_lo[:, :C_out] = scales_np[np.minimum(base, num_blocks - 1)]
    stab_hi[:, :C_out] = scales_np[np.minimum(base + 1, num_blocks - 1)]
    off_np = np.zeros((1, CO_p), dtype=np.int32)
    off_np[0, :C_out] = (cc * K) % BLOCK_SIZE

    # -- LoRA factors (fold targets) and bias, zero-padded to the kernel layout --
    aT_np = np.zeros((Kp, R8), dtype=np.float32)
    aT_np[:K, :R] = np.asarray(a4d).reshape(R, K).T
    bT_np = np.zeros((R8, CO_p), dtype=np.float32)
    bT_np[:R, :C_out] = np.asarray(b4d).reshape(C_out, R).T
    bias_np = np.zeros((1, CO_p), dtype=np.float32)
    bias_np[0, :C_out] = np.asarray(bias).reshape(-1)

    co_tile = 256 if CO_p % 256 == 0 else 128

    return dict(
        qwords=qwords, stab_lo=jnp.asarray(stab_lo), stab_hi=jnp.asarray(stab_hi),
        off=jnp.asarray(off_np), aT=jnp.asarray(aT_np), bT=jnp.asarray(bT_np),
        bias=jnp.asarray(bias_np),
        C_out=C_out, C_in=C_in_g, kH=kH, kW=kW,
        K=K, Kp=Kp, Kw=Kw, CO_p=CO_p, R8=R8, n_slab=n_slab, co_tile=co_tile,
    )


# ----------------------------------------------------------------------------
# Forward pass of TrueQuantizedConv2d (groups=1, dilation=1)
# ----------------------------------------------------------------------------
def true_quantized_conv2d(x, prep, stride=(1, 1), padding=(1, 1), tm_target=512):
    # TODO(synk): groups != 1 and dilation != 1 are not implemented in the fused path.
    N, C_in, H, W = x.shape
    assert C_in == prep["C_in"]
    C_out, kH, kW = prep["C_out"], prep["kH"], prep["kW"]
    K, Kp, Kw, CO_p, R8, n_slab, co_tile = (
        prep[k] for k in ("K", "Kp", "Kw", "CO_p", "R8", "n_slab", "co_tile"))
    sh, sw = stride
    ph, pw = padding
    H_out = (H + 2 * ph - kH) // sh + 1
    W_out = (W + 2 * pw - kW) // sw + 1

    # ---- kernel 1: dequant + LoRA fold, executed once per forward ----
    w_eff = pl.pallas_call(
        _dequant_fold_kernel,
        out_shape=jax.ShapeDtypeStruct((Kp, CO_p), jnp.bfloat16),
        grid_spec=pltpu.PrefetchScalarGridSpec(
            num_scalar_prefetch=0,
            grid=(CO_p // co_tile,),
            in_specs=[
                pl.BlockSpec((Kw, co_tile), lambda i: (0, i)),       # packed 4-bit weight
                pl.BlockSpec((n_slab, co_tile), lambda i: (0, i)),   # per-slab low scales
                pl.BlockSpec((n_slab, co_tile), lambda i: (0, i)),   # per-slab high scales
                pl.BlockSpec((1, co_tile), lambda i: (0, i)),        # per-column block offset
                pl.BlockSpec((Kp, R8), lambda i: (0, 0)),            # lora_A^T
                pl.BlockSpec((R8, co_tile), lambda i: (0, i)),       # lora_B^T
            ],
            out_specs=pl.BlockSpec((Kp, co_tile), lambda i: (0, i)),
        ),
        compiler_params=pltpu.CompilerParams(
            dimension_semantics=("parallel",),
            vmem_limit_bytes=VMEM_LIMIT_BYTES),
    )(prep["qwords"], prep["stab_lo"], prep["stab_hi"], prep["off"],
      prep["aT"], prep["bT"])

    # Tiny XLA glue on the weight only (K*CO_p bf16): drop the padded rows (they dequantize to
    # bounded garbage by design) and reorder from flat (c,kh,kw) rows to tap-major
    # (kh*kW+kw, C_in, CO_p) so kernel 2 slices one (C_in, CO_p) slab per conv tap.
    w3 = w_eff[:K].reshape(C_in, kH * kW, CO_p).transpose(1, 0, 2)

    # ---- activation prep (single light XLA pass): bf16, NHWC, spatial zero-pad ----
    # No im2col materialization any more; kernel 2 assembles patches in VMEM.
    th = max(1, min(H_out, -(-tm_target // W_out)))      # output rows per tile (tm ~ tm_target)
    T = -(-H_out // th)
    H_out_pad = T * th
    Hp = H + 2 * ph
    rows_needed = (H_out_pad - 1) * sh + kH              # keep all VMEM reads in bounds
    extra_rows = max(0, rows_needed - Hp)
    Hp_ext = Hp + extra_rows
    Wp = W + 2 * pw
    x_nhwc = jnp.pad(x.astype(jnp.bfloat16).transpose(0, 2, 3, 1),
                     ((0, 0), (ph, ph + extra_rows), (pw, pw), (0, 0)))

    tm = th * W_out
    kernel = _make_fused_conv_kernel(kH, kW, C_in, th, W_out, sh, sw)
    out3 = pl.pallas_call(
        kernel,
        out_shape=jax.ShapeDtypeStruct((N * T, tm, CO_p), jnp.bfloat16),
        grid_spec=pltpu.PrefetchScalarGridSpec(
            num_scalar_prefetch=0,
            grid=(N, T),
            in_specs=[
                # whole padded image per sample; constant block index across the T row tiles
                # so it is fetched once per sample and stays VMEM-resident.
                pl.BlockSpec((None, Hp_ext, Wp, C_in), lambda n, t: (n, 0, 0, 0)),
                pl.BlockSpec((kH * kW, C_in, CO_p), lambda n, t: (0, 0, 0)),   # W_eff (resident)
                pl.BlockSpec((1, CO_p), lambda n, t: (0, 0)),                  # bias
            ],
            out_specs=pl.BlockSpec((None, tm, CO_p), lambda n, t: (n * T + t, 0, 0)),
        ),
        compiler_params=pltpu.CompilerParams(
            dimension_semantics=("parallel", "parallel"),
            vmem_limit_bytes=VMEM_LIMIT_BYTES),
    )(x_nhwc, w3, prep["bias"])

    # back to NCHW (module semantics); padded rows / channels are sliced off here.
    out = (out3.reshape(N, H_out_pad, W_out, CO_p)[:, :H_out, :, :C_out]
           .transpose(0, 3, 1, 2).astype(jnp.float32))
    return out


# ----------------------------------------------------------------------------
# Deterministic in-script "quantize()" (mirrors _BlockQuantizer.quantize_block,
# uniform, 4-bit, block_size=64).  Pure setup, done once in NumPy.
# ----------------------------------------------------------------------------
def quantize_weight_uniform(w2d_np):
    flat = w2d_np.reshape(-1).astype(np.float32)
    numel = flat.size
    num_blocks = (numel + BLOCK_SIZE - 1) // BLOCK_SIZE
    padded = np.zeros(num_blocks * BLOCK_SIZE, dtype=np.float32)
    padded[:numel] = flat
    blocks = padded.reshape(num_blocks, BLOCK_SIZE)
    bmin = blocks.min(axis=-1, keepdims=True)
    bmax = blocks.max(axis=-1, keepdims=True)
    scales = np.maximum(np.abs(bmin), np.abs(bmax))
    scales = np.where(scales == 0, 1.0, scales)
    scaled = blocks / scales
    idx = np.argmin(np.abs(scaled[..., None] - UNIFORM_TABLE[None, None, :]), axis=-1)
    idx_flat = idx.reshape(-1).astype(np.uint8)
    pairs = idx_flat.reshape(-1, 8 // NUM_BITS)                 # pack 2 nibbles / byte
    packed = (pairs[:, 0] | (pairs[:, 1] << NUM_BITS)).astype(np.uint8)[:, None]
    return packed, scales.reshape(-1).astype(np.float32)


# ----------------------------------------------------------------------------
# Pure-JAX reference (same semantics as the PyTorch forward) for validation.
# ----------------------------------------------------------------------------
def reference_forward(x, packed, scales, w4d_shape, a4d, b4d, bias, stride, padding):
    C_out, C_in_g, kH, kW = w4d_shape
    K = C_in_g * kH * kW
    bytes_ = packed[:, 0].astype(jnp.int32)
    low = bytes_ & 15
    high = (bytes_ >> 4) & 15
    idx_flat = jnp.stack([low, high], axis=-1).reshape(-1)
    table = jnp.asarray(UNIFORM_TABLE)
    deq = table[idx_flat] * jnp.repeat(scales, BLOCK_SIZE)
    w4d = deq[:C_out * K].reshape(w4d_shape)
    pads = [(padding[0], padding[0]), (padding[1], padding[1])]
    dn = ("NCHW", "OIHW", "NCHW")
    base = lax.conv_general_dilated(x, w4d, stride, pads, dimension_numbers=dn)
    la = lax.conv_general_dilated(x, a4d, stride, pads, dimension_numbers=dn)
    lb = lax.conv_general_dilated(la, b4d, (1, 1), [(0, 0), (0, 0)], dimension_numbers=dn)
    return base + bias[None, :, None, None] + lb


if __name__ == "__main__":
    key = jax.random.PRNGKey(0)
    k1, k2, k3, k4, k5 = jax.random.split(key, 5)

    # small shapes consistent with the module
    N, C_in, H, W = 2, 4, 16, 16
    C_out, kH, kW = 8, 3, 3
    stride, padding = (1, 1), (1, 1)
    # module clamps reduced_rank = min(in_channels, out_channels, 16)
    rank = min(C_in, C_out, 16)

    # deterministic parameter init (synthetic, no checkpoint load)
    w4d = jax.random.normal(k1, (C_out, C_in, kH, kW), jnp.float32) * 0.5
    packed_np, scales_np = quantize_weight_uniform(np.asarray(w4d).reshape(C_out, -1))
    packed = jnp.asarray(packed_np)
    scales = jnp.asarray(scales_np)
    a4d = jax.random.normal(k2, (rank, C_in, kH, kW), jnp.float32) * 0.1   # lora_A weight
    b4d = jax.random.normal(k3, (C_out, rank, 1, 1), jnp.float32) * 0.1    # lora_B weight
    bias = jax.random.normal(k4, (C_out,), jnp.float32) * 0.1
    x = jax.random.normal(k5, (N, C_in, H, W), jnp.float32)

    prep = prepare_quantized_conv2d(packed, scales, (C_out, C_in, kH, kW), a4d, b4d, bias)
    out = true_quantized_conv2d(x, prep, stride, padding, tm_target=512)
    out = jax.block_until_ready(out)

    ref = reference_forward(x, packed, scales, (C_out, C_in, kH, kW),
                            a4d, b4d, bias, stride, padding)
    assert out.shape == ref.shape == (N, C_out, H, W)
    # tolerance appropriate for bf16 MXU inputs + bf16 output store (f32 accumulation)
    np.testing.assert_allclose(np.asarray(out), np.asarray(ref), rtol=5e-2, atol=1e-1)
    print("KERNEL_OK")
</pallas_src>

<mosaic_0001>
module attributes {stable_mosaic.version = 11 : i64} {
  func.func @_dequant_fold_kernel(%arg0: i32, %arg1: memref<8x128xi32, #tpu.memory_space<vmem>>, %arg2: memref<1x128xf32, #tpu.memory_space<vmem>>, %arg3: memref<1x128xf32, #tpu.memory_space<vmem>>, %arg4: memref<1x128xi32, #tpu.memory_space<vmem>>, %arg5: memref<64x8xf32, #tpu.memory_space<vmem>>, %arg6: memref<8x128xf32, #tpu.memory_space<vmem>>, %arg7: memref<64x128xbf16, #tpu.memory_space<vmem>>) attributes {dimension_semantics = [#tpu.dimension_semantics<parallel>], iteration_bounds = array<i64: 1>, scalar_prefetch = 0 : i64, scratch_operands = 0 : i64, tpu.core_type = #tpu.core_type<tc>, window_params = [{transform_indices = @transform_0, window_bounds = array<i64: 8, 128>}, {transform_indices = @transform_1, window_bounds = array<i64: 1, 128>}, {transform_indices = @transform_2, window_bounds = array<i64: 1, 128>}, {transform_indices = @transform_3, window_bounds = array<i64: 1, 128>}, {pipeline_mode = #tpu.pipeline_mode<synchronous>, transform_indices = @transform_4, window_bounds = array<i64: 64, 8>}, {transform_indices = @transform_5, window_bounds = array<i64: 8, 128>}, {transform_indices = @transform_6, window_bounds = array<i64: 64, 128>}]} {
    %c0 = arith.constant 0 : index
    %c0_0 = arith.constant 0 : index
    %0 = vector.load %arg1[%c0, %c0_0] : memref<8x128xi32, #tpu.memory_space<vmem>>, vector<8x128xi32>
    %c0_i32 = arith.constant 0 : i32
    %1 = vector.broadcast %c0_i32 : i32 to vector<8x128xi32>
    %2 = arith.shrsi %0, %1 : vector<8x128xi32>
    %c15_i32 = arith.constant 15 : i32
    %3 = vector.broadcast %c15_i32 : i32 to vector<8x128xi32>
    %4 = arith.andi %2, %3 : vector<8x128xi32>
    %c4_i32 = arith.constant 4 : i32
    %5 = vector.broadcast %c4_i32 : i32 to vector<8x128xi32>
    %6 = arith.shrsi %0, %5 : vector<8x128xi32>
    %c15_i32_1 = arith.constant 15 : i32
    %7 = vector.broadcast %c15_i32_1 : i32 to vector<8x128xi32>
    %8 = arith.andi %6, %7 : vector<8x128xi32>
    %c8_i32 = arith.constant 8 : i32
    %9 = vector.broadcast %c8_i32 : i32 to vector<8x128xi32>
    %10 = arith.shrsi %0, %9 : vector<8x128xi32>
    %c15_i32_2 = arith.constant 15 : i32
    %11 = vector.broadcast %c15_i32_2 : i32 to vector<8x128xi32>
    %12 = arith.andi %10, %11 : vector<8x128xi32>
    %c12_i32 = arith.constant 12 : i32
    %13 = vector.broadcast %c12_i32 : i32 to vector<8x128xi32>
    %14 = arith.shrsi %0, %13 : vector<8x128xi32>
    %c15_i32_3 = arith.constant 15 : i32
    %15 = vector.broadcast %c15_i32_3 : i32 to vector<8x128xi32>
    %16 = arith.andi %14, %15 : vector<8x128xi32>
    %c16_i32 = arith.constant 16 : i32
    %17 = vector.broadcast %c16_i32 : i32 to vector<8x128xi32>
    %18 = arith.shrsi %0, %17 : vector<8x128xi32>
    %c15_i32_4 = arith.constant 15 : i32
    %19 = vector.broadcast %c15_i32_4 : i32 to vector<8x128xi32>
    %20 = arith.andi %18, %19 : vector<8x128xi32>
    %c20_i32 = arith.constant 20 : i32
    %21 = vector.broadcast %c20_i32 : i32 to vector<8x128xi32>
    %22 = arith.shrsi %0, %21 : vector<8x128xi32>
    %c15_i32_5 = arith.constant 15 : i32
    %23 = vector.broadcast %c15_i32_5 : i32 to vector<8x128xi32>
    %24 = arith.andi %22, %23 : vector<8x128xi32>
    %c24_i32 = arith.constant 24 : i32
    %25 = vector.broadcast %c24_i32 : i32 to vector<8x128xi32>
    %26 = arith.shrsi %0, %25 : vector<8x128xi32>
    %c15_i32_6 = arith.constant 15 : i32
    %27 = vector.broadcast %c15_i32_6 : i32 to vector<8x128xi32>
    %28 = arith.andi %26, %27 : vector<8x128xi32>
    %c28_i32 = arith.constant 28 : i32
    %29 = vector.broadcast %c28_i32 : i32 to vector<8x128xi32>
    %30 = arith.shrsi %0, %29 : vector<8x128xi32>
    %c15_i32_7 = arith.constant 15 : i32
    %31 = vector.broadcast %c15_i32_7 : i32 to vector<8x128xi32>
    %32 = arith.andi %30, %31 : vector<8x128xi32>
    %33 = tpu.concatenate %4, %8, %12, %16, %20, %24, %28, %32 in 0 : vector<8x128xi32>, vector<8x128xi32>, vector<8x128xi32>, vector<8x128xi32>, vector<8x128xi32>, vector<8x128xi32>, vector<8x128xi32>, vector<8x128xi32> -> vector<64x128xi32>
    %34 = arith.sitofp %33 : vector<64x128xi32> to vector<64x128xf32>
    %cst = arith.constant 0.13333334 : f32
    %35 = vector.broadcast %cst : f32 to vector<64x128xf32>
    %36 = arith.mulf %34, %35 : vector<64x128xf32>
    %cst_8 = arith.constant 1.000000e+00 : f32
    %37 = vector.broadcast %cst_8 : f32 to vector<64x128xf32>
    %38 = arith.subf %36, %37 : vector<64x128xf32>
    %c0_9 = arith.constant 0 : index
    %c0_10 = arith.constant 0 : index
    %39 = vector.load %arg4[%c0_9, %c0_10] : memref<1x128xi32, #tpu.memory_space<vmem>>, vector<1x128xi32>
    %40 = tpu.iota {dimensions = array<i32: 0>} : vector<64x128xi32>
    %41 = vector.broadcast %39 : vector<1x128xi32> to vector<64x128xi32>
    %42 = arith.addi %40, %41 : vector<64x128xi32>
    %c64_i32 = arith.constant 64 : i32
    %43 = vector.broadcast %c64_i32 : i32 to vector<64x128xi32>
    %44 = arith.cmpi sge, %42, %43 : vector<64x128xi32>
    %c0_11 = arith.constant 0 : index
    %c0_12 = arith.constant 0 : index
    %45 = vector.load %arg3[%c0_11, %c0_12] : memref<1x128xf32, #tpu.memory_space<vmem>>, vector<1x128xf32>
    %c0_13 = arith.constant 0 : index
    %c0_14 = arith.constant 0 : index
    %46 = vector.load %arg2[%c0_13, %c0_14] : memref<1x128xf32, #tpu.memory_space<vmem>>, vector<1x128xf32>
    %47 = vector.shape_cast %45 : vector<1x128xf32> to vector<1x128xf32>
    %48 = vector.broadcast %47 : vector<1x128xf32> to vector<64x128xf32>
    %49 = vector.shape_cast %46 : vector<1x128xf32> to vector<1x128xf32>
    %50 = vector.broadcast %49 : vector<1x128xf32> to vector<64x128xf32>
    %51 = arith.select %44, %48, %50 : vector<64x128xi1>, vector<64x128xf32>
    %52 = arith.mulf %38, %51 : vector<64x128xf32>
    %c0_15 = arith.constant 0 : index
    %c0_16 = arith.constant 0 : index
    %53 = vector.load %arg5[%c0_15, %c0_16] : memref<64x8xf32, #tpu.memory_space<vmem>>, vector<64x8xf32>
    %c0_17 = arith.constant 0 : index
    %c0_18 = arith.constant 0 : index
    %54 = vector.load %arg6[%c0_17, %c0_18] : memref<8x128xf32, #tpu.memory_space<vmem>>, vector<8x128xf32>
    %cst_19 = arith.constant dense<0.000000e+00> : vector<64x128xf32>
    %55 = tpu.matmul %53, %54, %cst_19 {dimension_numbers = #tpu.dot_dimension_numbers<[1], [0], [0], [1], [0, 0, 1, 1], [], []>} : vector<64x8xf32>, vector<8x128xf32>, vector<64x128xf32> -> vector<64x128xf32>
    %56 = arith.addf %52, %55 : vector<64x128xf32>
    %57 = arith.truncf %56 : vector<64x128xf32> to vector<64x128xbf16>
    %c0_20 = arith.constant 0 : index
    %c0_21 = arith.constant 0 : index
    %58 = vector.load %arg7[%c0_20, %c0_21] : memref<64x128xbf16, #tpu.memory_space<vmem>>, vector<64x128xbf16>
    tpu.vector_store %arg7[%c0_20, %c0_21], %57 {strides = array<i32>} : memref<64x128xbf16, #tpu.memory_space<vmem>>, vector<64x128xbf16>,
    return
  }
  func.func @transform_0(%arg0: i32) -> (i32, i32) {
    %c0_i32 = arith.constant 0 : i32
    %c0_i32_0 = arith.constant 0 : i32
    return %c0_i32, %arg0 : i32, i32
  }
  func.func @transform_1(%arg0: i32) -> (i32, i32) {
    %c0_i32 = arith.constant 0 : i32
    %c0_i32_0 = arith.constant 0 : i32
    return %c0_i32, %arg0 : i32, i32
  }
  func.func @transform_2(%arg0: i32) -> (i32, i32) {
    %c0_i32 = arith.constant 0 : i32
    %c0_i32_0 = arith.constant 0 : i32
    return %c0_i32, %arg0 : i32, i32
  }
  func.func @transform_3(%arg0: i32) -> (i32, i32) {
    %c0_i32 = arith.constant 0 : i32
    %c0_i32_0 = arith.constant 0 : i32
    return %c0_i32, %arg0 : i32, i32
  }
  func.func @transform_4(%arg0: i32) -> (i32, i32) {
    %c0_i32 = arith.constant 0 : i32
    %c0_i32_0 = arith.constant 0 : i32
    %c0_i32_1 = arith.constant 0 : i32
    return %c0_i32, %c0_i32_0 : i32, i32
  }
  func.func @transform_5(%arg0: i32) -> (i32, i32) {
    %c0_i32 = arith.constant 0 : i32
    %c0_i32_0 = arith.constant 0 : i32
    return %c0_i32, %arg0 : i32, i32
  }
  func.func @transform_6(%arg0: i32) -> (i32, i32) {
    %c0_i32 = arith.constant 0 : i32
    %c0_i32_0 = arith.constant 0 : i32
    return %c0_i32, %arg0 : i32, i32
  }
}

</mosaic_0001>

<llo_original>
// kernel: tpu_custom_call.1
$region0: #{tpu_custom_call.1}
  #allocation0 [shape = 'u32[]', space=smem, size = 0x4, offset = 0x4, fixed_abs, tag = 'smem constant byte address 0x4 - core index']
  #allocation1 [shape = 'u32[144,128]{1,0:T(1,128)}', space=vmem, size = 0x12000, scoped, tag = 'internal scratch']
  %s0 = inlined_call_operand.vmem [shape: s32[8,128], index: 0, kind: input, shape index: {}]
  %s1 = inlined_call_operand.vmem [shape: f32[1,128], index: 1, kind: input, shape index: {}]
  %s2 = inlined_call_operand.vmem [shape: f32[1,128], index: 2, kind: input, shape index: {}]
  %s3 = inlined_call_operand.vmem [shape: s32[1,128], index: 3, kind: input, shape index: {}]
  %s4 = inlined_call_operand.vmem [shape: f32[64,8], index: 4, kind: input, shape index: {}]
  %s5 = inlined_call_operand.vmem [shape: f32[8,128], index: 5, kind: input, shape index: {}]
  %s6 = inlined_call_operand.hbm [shape: bf16[64,128], index: 6, kind: output, shape index: {}]
  %s7 = sld [smem:[#allocation0]]
  $region34: #{tpu_custom_call.1} parent=0
    _
  %s9 = ssub.s32 1, %s7
  %s10 = scalar_select 0, %s9, %s7
  $region1: #{tpu_custom_call.1} parent=0
    #allocation2 [shape = 'u8[16384]{0}', space=vmem, size = 0x4000, scoped, tag = 'output window, operand 0, single buffered']
    #allocation3 [shape = 's32[1]{0}', space=sflag, size = 0x4, scoped, tag = 'scoped memory for tpu_custom_call.1']
    %11 = vsyncpa [#allocation3], 0
    // Predicated region
    $region2: #{tpu_custom_call.1} parent=1 // pred_check
      _
    $region3: #{tpu_custom_call.1} parent=1 // pred_check_branch
      %13 = sbr.rel (0) target = $region5
    $region4: #{tpu_custom_call.1} parent=1 // pred_region
      _
    $region5: #{tpu_custom_call.1} parent=1 // pred_fallthru
      _
    // Predicated region
    $region6: #{tpu_custom_call.1} parent=1 // pred_check
      _
    $region7: #{tpu_custom_call.1} parent=1 // pred_check_branch
      %15 = sbr.rel (0) target = $region9
    $region8: #{tpu_custom_call.1} parent=1 // pred_region
      _
    $region9: #{tpu_custom_call.1} parent=1 // pred_fallthru
      _
    // Predicated region
    $region10: #{tpu_custom_call.1} parent=1 // pred_check
      _
    $region11: #{tpu_custom_call.1} parent=1 // pred_check_branch
      %17 = sbr.rel (0) target = $region13
    $region12: #{tpu_custom_call.1} parent=1 // pred_region
      _
    $region13: #{tpu_custom_call.1} parent=1 // pred_fallthru
      _
    // Predicated region
    $region14: #{tpu_custom_call.1} parent=1 // pred_check
      _
    $region15: #{tpu_custom_call.1} parent=1 // pred_check_branch
      %19 = sbr.rel (0) target = $region17
    $region16: #{tpu_custom_call.1} parent=1 // pred_region
      _
    $region17: #{tpu_custom_call.1} parent=1 // pred_fallthru
      _
    // Predicated region
    $region18: #{tpu_custom_call.1} parent=1 // pred_check
      _
    $region19: #{tpu_custom_call.1} parent=1 // pred_check_branch
      %21 = sbr.rel (0) target = $region21
    $region20: #{tpu_custom_call.1} parent=1 // pred_region
      _
    $region21: #{tpu_custom_call.1} parent=1 // pred_fallthru
      _
    // Predicated region
    $region22: #{tpu_custom_call.1} parent=1 // pred_check
      _
    $region23: #{tpu_custom_call.1} parent=1 // pred_check_branch
      %23 = sbr.rel (0) target = $region25
    $region24: #{tpu_custom_call.1} parent=1 // pred_region
      _
    $region25: #{tpu_custom_call.1} parent=1 // pred_fallthru
      _
    %v24 = vld [vmem:[%s0] sm:$0xff]
    %v25 = vand.u32 %v24, 15
    %v26 = vshra.s32 %v24, 4
    %v27 = vand.u32 %v26, 15
    %v28 = vshra.s32 %v24, 8
    %v29 = vand.u32 %v28, 15
    %v30 = vshra.s32 %v24, 12
    %v31 = vand.u32 %v30, 15
    %v32 = vshra.s32 %v24, 16
    %v33 = vand.u32 %v32, 15
    %v34 = vshra.s32 %v24, 20
    %v35 = vand.u32 %v34, 15
    %v36 = vshra.s32 %v24, 24
    %v37 = vand.u32 %v36, 15
    %v38 = vshra.s32 %v24, 28
    %v39 = vand.u32 %v38, 15
    %v40 = vcvt.s32.f32 %v25
    %v41 = vcvt.s32.f32 %v27
    %v42 = vcvt.s32.f32 %v29
    %v43 = vcvt.s32.f32 %v31
    %v44 = vcvt.s32.f32 %v33
    %v45 = vcvt.s32.f32 %v35
    %v46 = vcvt.s32.f32 %v37
    %v47 = vcvt.s32.f32 %v39
    %v48 = vmul.f32 %v40, 0.13333334
    %v49 = vmul.f32 %v41, 0.13333334
    %v50 = vmul.f32 %v42, 0.13333334
    %v51 = vmul.f32 %v43, 0.13333334
    %v52 = vmul.f32 %v44, 0.13333334
    %v53 = vmul.f32 %v45, 0.13333334
    %v54 = vmul.f32 %v46, 0.13333334
    %v55 = vmul.f32 %v47, 0.13333334
    %v56 = vsub.f32 %v48, 1.0
    %v57 = vsub.f32 %v49, 1.0
    %v58 = vsub.f32 %v50, 1.0
    %v59 = vsub.f32 %v51, 1.0
    %v60 = vsub.f32 %v52, 1.0
    %v61 = vsub.f32 %v53, 1.0
    %v62 = vsub.f32 %v54, 1.0
    %v63 = vsub.f32 %v55, 1.0
    %v64 = vld [vmem:[%s3] sm:$0x1]
    %v65 = vlaneseq
    %v66 = vshrl.u32 %v65, 7
    %v67 = vadd.s32 %v66, 8
    %v68 = vadd.s32 %v66, 16
    %v69 = vadd.s32 %v66, 24
    %v70 = vadd.s32 %v66, 32
    %v71 = vadd.s32 %v66, 40
    %v72 = vadd.s32 %v66, 48
    %v73 = vadd.s32 %v66, 56
    %v74 = vlaneseq
    %v75 = vshrl.u32 %v74, 7
    %v76 = vsub.s32 0, %v75
    %v77 = vrot.slane %v64, %v76
    %v78 = vadd.s32 %v66, %v77
    %v79 = vadd.s32 %v67, %v77
    %v80 = vadd.s32 %v68, %v77
    %v81 = vadd.s32 %v69, %v77
    %v82 = vadd.s32 %v70, %v77
    %v83 = vadd.s32 %v71, %v77
    %v84 = vadd.s32 %v72, %v77
    %v85 = vadd.s32 %v73, %v77
    %vm86 = vcmp.ge.s32.totalorder %v78, 64
    %vm87 = vcmp.ge.s32.totalorder %v79, 64
    %vm88 = vcmp.ge.s32.totalorder %v80, 64
    %vm89 = vcmp.ge.s32.totalorder %v81, 64
    %vm90 = vcmp.ge.s32.totalorder %v82, 64
    %vm91 = vcmp.ge.s32.totalorder %v83, 64
    %vm92 = vcmp.ge.s32.totalorder %v84, 64
    %vm93 = vcmp.ge.s32.totalorder %v85, 64
    %v94 = vld [vmem:[%s2] sm:$0x1]
    %v95 = vld [vmem:[%s1] sm:$0x1]
    %v97 = vlaneseq
    %v98 = vshrl.u32 %v97, 7
    %v99 = vsub.s32 0, %v98
    %v100 = vrot.slane %v94, %v99
    %v103 = vlaneseq
    %v104 = vshrl.u32 %v103, 7
    %v105 = vsub.s32 0, %v104
    %v106 = vrot.slane %v95, %v105
    %v108 = vsel %vm86, %v100, %v106
    %v109 = vsel %vm87, %v100, %v106
    %v110 = vsel %vm88, %v100, %v106
    %v111 = vsel %vm89, %v100, %v106
    %v112 = vsel %vm90, %v100, %v106
    %v113 = vsel %vm91, %v100, %v106
    %v114 = vsel %vm92, %v100, %v106
    %v115 = vsel %vm93, %v100, %v106
    %v116 = vmul.f32 %v56, %v108
    %v117 = vmul.f32 %v57, %v109
    %v118 = vmul.f32 %v58, %v110
    %v119 = vmul.f32 %v59, %v111
    %v120 = vmul.f32 %v60, %v112
    %v121 = vmul.f32 %v61, %v113
    %v122 = vmul.f32 %v62, %v114
    %v123 = vmul.f32 %v63, %v115
    %v124 = vld [vmem:[%s4] sm:$0xff]
    %v125 = vld [vmem:[%s4 + $0x8] sm:$0xff]
    %v126 = vld [vmem:[%s4 + $0x10] sm:$0xff]
    %v127 = vld [vmem:[%s4 + $0x18] sm:$0xff]
    %v128 = vld [vmem:[%s4 + $0x20] sm:$0xff]
    %v129 = vld [vmem:[%s4 + $0x28] sm:$0xff]
    %v130 = vld [vmem:[%s4 + $0x30] sm:$0xff]
    %v131 = vld [vmem:[%s4 + $0x38] sm:$0xff]
    %v132 = vld [vmem:[%s5] sm:$0xff]
    %vm133 = vcmask 64512
    %v135 = vsel %vm133, %v124, 0
    %v138 = vsel %vm133, %v125, 0
    %v141 = vsel %vm133, %v126, 0
    %v144 = vsel %vm133, %v127, 0
    %v147 = vsel %vm133, %v128, 0
    %v150 = vsel %vm133, %v129, 0
    %v153 = vsel %vm133, %v130, 0
    %v156 = vsel %vm133, %v131, 0
    %158 = vmatprep.subr.mxu0 0.0
    %159 = vmatpush1.msra.mxu0 %v132
    %160 = vmatprep.subr.mxu0 0.0
    %161 = vmatpush1.msra.mxu0 0.0
    %162 = vmatprep.subr.mxu0 0.0
    %163 = vmatpush1.msra.mxu0 0.0
    %164 = vmatprep.subr.mxu0 0.0
    %165 = vmatpush1.msra.mxu0 0.0
    %166 = vmatprep.subr.mxu0 0.0
    %167 = vmatpush1.msra.mxu0 0.0
    %168 = vmatprep.subr.mxu0 0.0
    %169 = vmatpush1.msra.mxu0 0.0
    %170 = vmatprep.subr.mxu0 0.0
    %171 = vmatpush1.msra.mxu0 0.0
    %172 = vmatprep.subr.mxu0 0.0
    %173 = vmatpush1.msra.mxu0 0.0
    %174 = vmatprep.subr.mxu0 0.0
    %175 = vmatpush1.msra.mxu0 0.0
    %176 = vmatprep.subr.mxu0 0.0
    %177 = vmatpush1.msra.mxu0 0.0
    %178 = vmatprep.subr.mxu0 0.0
    %179 = vmatpush1.msra.mxu0 0.0
    %180 = vmatprep.subr.mxu0 0.0
    %181 = vmatpush1.msra.mxu0 0.0
    %182 = vmatprep.subr.mxu0 0.0
    %183 = vmatpush1.msra.mxu0 0.0
    %184 = vmatprep.subr.mxu0 0.0
    %185 = vmatpush1.msra.mxu0 0.0
    %186 = vmatprep.subr.mxu0 0.0
    %187 = vmatpush1.msra.mxu0 0.0
    %188 = vmatprep.subr.mxu0 0.0
    %189 = vmatpush1.msra.mxu0 0.0
    %190 = vmatprep.subr.mxu0 0.0
    %191 = vmatpush1.msra.mxu0 0.0
    %192 = vmatprep.subr.mxu0 0.0
    %193 = vmatpush1.msra.mxu0 0.0
    %194 = vmatprep.subr.mxu0 0.0
    %195 = vmatpush1.msra.mxu0 0.0
    %196 = vmatprep.subr.mxu0 0.0
    %197 = vmatpush1.msra.mxu0 0.0
    %198 = vmatprep.subr.mxu0 0.0
    %199 = vmatpush1.msra.mxu0 0.0
    %200 = vmatprep.subr.mxu0 0.0
    %201 = vmatpush1.msra.mxu0 0.0
    %202 = vmatprep.subr.mxu0 0.0
    %203 = vmatpush1.msra.mxu0 0.0
    %204 = vmatprep.subr.mxu0 0.0
    %205 = vmatpush1.msra.mxu0 0.0
    %206 = vmatprep.subr.mxu0 0.0
    %207 = vmatpush1.msra.mxu0 0.0
    %208 = vmatprep.subr.mxu0 0.0
    %209 = vmatpush1.msra.mxu0 0.0
    %210 = vmatprep.subr.mxu0 0.0
    %211 = vmatpush1.msra.mxu0 0.0
    %212 = vmatprep.subr.mxu0 0.0
    %213 = vmatpush1.msra.mxu0 0.0
    %214 = vmatprep.subr.mxu0 0.0
    %215 = vmatpush1.msra.mxu0 0.0
    %216 = vmatprep.subr.mxu0 0.0
    %217 = vmatpush1.msra.mxu0 0.0
    %218 = vmatprep.subr.mxu0 0.0
    %219 = vmatpush1.msra.mxu0 0.0
    %220 = vmatprep.subr.mxu0 0.0
    %221 = vmatpush1.msra.mxu0 0.0
    %222 = vmatprep.mubr.f32.mxu0 0.0
    %223 = vmatmul.mubr.f32.gmra.mrb[0].mxu0 %v135
    %v224 = vpop.f32.mrb[0].mxu0
    %v225 = vadd.f32 0.0, %v224
    %v226 = vpop.f32.mrb[0].mxu0
    %227 = vmatprep.mubr.f32.mxu0 0.0
    %228 = vmatmul.mubr.f32.gmra.mrb[0].mxu0 %v138
    %v229 = vpop.f32.mrb[0].mxu0
    %v230 = vadd.f32 0.0, %v229
    %v231 = vpop.f32.mrb[0].mxu0
    %232 = vmatprep.mubr.f32.mxu0 0.0
    %233 = vmatmul.mubr.f32.gmra.mrb[0].mxu0 %v141
    %v234 = vpop.f32.mrb[0].mxu0
    %v235 = vadd.f32 0.0, %v234
    %v236 = vpop.f32.mrb[0].mxu0
    %237 = vmatprep.mubr.f32.mxu0 0.0
    %238 = vmatmul.mubr.f32.gmra.mrb[0].mxu0 %v144
    %v239 = vpop.f32.mrb[0].mxu0
    %v240 = vadd.f32 0.0, %v239
    %v241 = vpop.f32.mrb[0].mxu0
    %242 = vmatprep.mubr.f32.mxu0 0.0
    %243 = vmatmul.mubr.f32.gmra.mrb[0].mxu0 %v147
    %v244 = vpop.f32.mrb[0].mxu0
    %v245 = vadd.f32 0.0, %v244
    %v246 = vpop.f32.mrb[0].mxu0
    %247 = vmatprep.mubr.f32.mxu0 0.0
    %248 = vmatmul.mubr.f32.gmra.mrb[0].mxu0 %v150
    %v249 = vpop.f32.mrb[0].mxu0
    %v250 = vadd.f32 0.0, %v249
    %v251 = vpop.f32.mrb[0].mxu0
    %252 = vmatprep.mubr.f32.mxu0 0.0
    %253 = vmatmul.mubr.f32.gmra.mrb[0].mxu0 %v153
    %v254 = vpop.f32.mrb[0].mxu0
    %v255 = vadd.f32 0.0, %v254
    %v256 = vpop.f32.mrb[0].mxu0
    %257 = vmatprep.mubr.f32.mxu0 0.0
    %258 = vmatmul.mubr.f32.gmra.mrb[0].mxu0 %v156
    %v259 = vpop.f32.mrb[0].mxu0
    %v260 = vadd.f32 0.0, %v259
    %v261 = vpop.f32.mrb[0].mxu0
    %262 = vdwg.mxu0
    %v263 = vadd.f32 %v116, %v225
    %v264 = vadd.f32 %v117, %v230
    %v265 = vadd.f32 %v118, %v235
    %v266 = vadd.f32 %v119, %v240
    %v267 = vadd.f32 %v120, %v245
    %v268 = vadd.f32 %v121, %v250
    %v269 = vadd.f32 %v122, %v255
    %v270 = vadd.f32 %v123, %v260
    %v271 = vpack.c.bf16 %v264, %v263
    %v272 = vpack.c.bf16 %v266, %v265
    %v273 = vpack.c.bf16 %v268, %v267
    %v274 = vpack.c.bf16 %v270, %v269
    %v279 = vunpack.c.l.b16 %v271
    %v280 = vunpack.c.h.b16 %v271
    %v281 = vunpack.c.l.b16 %v272
    %v282 = vunpack.c.h.b16 %v272
    %v283 = vunpack.c.l.b16 %v273
    %v284 = vunpack.c.h.b16 %v273
    %v285 = vunpack.c.l.b16 %v274
    %v286 = vunpack.c.h.b16 %v274
    %v287 = vpack.c.b16 %v279, %v279
    %v288 = vpack.c.b16 %v280, %v280
    %v289 = vpack.c.b16 %v281, %v281
    %v290 = vpack.c.b16 %v282, %v282
    %v291 = vpack.c.b16 %v283, %v283
    %v292 = vpack.c.b16 %v284, %v284
    %v293 = vpack.c.b16 %v285, %v285
    %v294 = vpack.c.b16 %v286, %v286
    %303 = vst [vmem:[#allocation2] sm:$0xf] %v287
    %304 = vst [vmem:[#allocation2 + $0x4] sm:$0xf] %v288
    %305 = vst [vmem:[#allocation2 + $0x8] sm:$0xf] %v289
    %306 = vst [vmem:[#allocation2 + $0xc] sm:$0xf] %v290
    %307 = vst [vmem:[#allocation2 + $0x10] sm:$0xf] %v291
    %308 = vst [vmem:[#allocation2 + $0x14] sm:$0xf] %v292
    %309 = vst [vmem:[#allocation2 + $0x18] sm:$0xf] %v293
    %310 = vst [vmem:[#allocation2 + $0x1c] sm:$0xf] %v294
    // Predicated region
    $region26: #{tpu_custom_call.1} parent=1 // pred_check
      _
    $region27: #{tpu_custom_call.1} parent=1 // pred_check_branch
      %312 = sbr.rel (0) target = $region29
    $region28: #{tpu_custom_call.1} parent=1 // pred_region
      %s314 = ssub.s32 512, 512
      %315 = vsyncadd [#allocation3], %s314
      %s316 = sshll.u32 [#allocation2], 4
      %s317 = int_to_ptr.vmem [resolvable:$true] %s316
      %322 = dma.vmem_to_hbm [thread:$0]  %s317, 512, %s6, [#allocation3], 64, 64, 4
    $region29: #{tpu_custom_call.1} parent=1 // pred_fallthru
      _
    // Predicated region
    $region30: #{tpu_custom_call.1} parent=1 // pred_check
      _
    $region31: #{tpu_custom_call.1} parent=1 // pred_check_branch
      %324 = sbr.rel (0) target = $region33
    $region32: #{tpu_custom_call.1} parent=1 // pred_region
      %325 = dma.done [#allocation3], 512
    $region33: #{tpu_custom_call.1} parent=1 // pred_fallthru
      _
    %326 = vsyncpa [#allocation3], 1

</llo_original>
